<compile_context>
chip_gen: v5e
topology: v5e:2x2
jax: 0.10.0
libtpu: 0.0.40
codegen_flags: <defaults>
</compile_context>

<pallas_src>
import jax
import jax.numpy as jnp
from jax.experimental import pallas as pl
from jax.experimental.pallas import tpu as pltpu

HIDDEN = 100    # logical feature width (matches the PyTorch module)
OUT = 1         # logical output width
PAD = 128       # lane-aligned hidden width used inside the kernel
TB_MAX = 2048   # max batch-tile rows per grid step


def _round_up(v, m):
    return ((v + m - 1) // m) * m


def _pad_to(a, shape):
    return jnp.pad(a, [(0, s - d) for d, s in zip(a.shape, shape)])


def deep_mlp_kernel(
    x_ref,
    w1_ref, b1_ref,
    w2_ref, b2_ref,
    w3_ref, b3_ref,
    w4_ref, b4_ref,
    w5_ref, b5_ref,
    w6_ref, b6_ref,
    o_ref,
):
    # In-kernel cast; the 100-wide contraction dim goes straight to the MXU.
    h = x_ref[...].astype(jnp.bfloat16)            # (tb, 100) bf16

    def linear_relu(h, w_ref, b_ref):
        y = jnp.dot(h, w_ref[...], preferred_element_type=jnp.float32)
        y = y + b_ref[...]                         # (1, 128) f32 bias broadcast
        # Cast before the ReLU: 0 is exact and the cast is monotonic; halves
        # the vregs the max touches on bf16-capable VALUs.
        return jnp.maximum(y.astype(jnp.bfloat16), 0)

    h = linear_relu(h, w1_ref, b1_ref)             # (tb, 128) bf16
    h = linear_relu(h, w2_ref, b2_ref)
    h = linear_relu(h, w3_ref, b3_ref)
    h = linear_relu(h, w4_ref, b4_ref)
    h = linear_relu(h, w5_ref, b5_ref)

    # Output layer (100 -> 1): elementwise mul + lane reduction (VPU + XLU)
    # instead of a skinny N=1 matmul; keeps the stored output 1 lane wide.
    prod = h.astype(jnp.float32) * w6_ref[...].astype(jnp.float32)   # (tb, 128)
    logit = jnp.sum(prod, axis=-1, keepdims=True) + b6_ref[...]      # (tb, 1)
    # Sigmoid: exp and the approx reciprocal both run on the EUP slot.
    o_ref[...] = pl.reciprocal(1.0 + jnp.exp(-logit), approx=True)


def deep_mlp(x, params, tb_max=TB_MAX):
    """x: (B, 100) float32.  params: 6 tuples (w, b); w:(in,out), b:(1,out)."""
    B = x.shape[0]
    # Large tile to amortize per-step overhead, but guarantee >=2 grid steps on
    # big batches (v7x has 2 TensorCores sharded over the parallel batch axis).
    tb = min(tb_max, max(8, _round_up(pl.cdiv(B, 2), 8)))
    grid = (pl.cdiv(B, tb),)                       # masked tail block if ragged

    flat_args = [x]
    in_specs = [pl.BlockSpec((tb, HIDDEN), lambda i: (i, 0))]

    # Hidden layers 1..5: zero-pad weights to 128 output lanes (layer 1 keeps a
    # 100-row contraction dim so the input needs no host-side pad/cast pass).
    for idx, (w, b) in enumerate(params[:-1]):
        k_in = HIDDEN if idx == 0 else PAD
        wp = _pad_to(w, (k_in, PAD)).astype(jnp.bfloat16)
        bp = _pad_to(b, (1, PAD)).astype(jnp.float32)
        flat_args.extend([wp, bp])
        # Constant index_map -> weights/biases stay VMEM-resident across steps.
        in_specs.extend([
            pl.BlockSpec((k_in, PAD), lambda i: (0, 0)),
            pl.BlockSpec((1, PAD), lambda i: (0, 0)),
        ])

    # Output layer: weight as a zero-padded (1, 128) row vector, scalar bias.
    w6, b6 = params[-1]
    w6p = _pad_to(w6.T, (1, PAD)).astype(jnp.bfloat16)
    b6p = b6.reshape(1, 1).astype(jnp.float32)
    flat_args.extend([w6p, b6p])
    in_specs.extend([
        pl.BlockSpec((1, PAD), lambda i: (0, 0)),
        pl.BlockSpec((1, 1), lambda i: (0, 0)),
    ])

    cost = pl.CostEstimate(
        flops=2 * B * (HIDDEN * PAD + 4 * PAD * PAD + PAD),
        transcendentals=2 * B,                          # exp + reciprocal / row
        bytes_accessed=B * (HIDDEN * 4 + OUT * 4)       # f32 x in, f32 y out
        + (HIDDEN * PAD + 4 * PAD * PAD + PAD) * 2      # bf16 weights
        + (5 * PAD + 1) * 4,                            # f32 biases
    )

    return pl.pallas_call(
        deep_mlp_kernel,
        out_shape=jax.ShapeDtypeStruct((B, OUT), jnp.float32),
        grid_spec=pltpu.PrefetchScalarGridSpec(
            num_scalar_prefetch=0,
            grid=grid,
            in_specs=in_specs,
            out_specs=pl.BlockSpec((tb, OUT), lambda i: (i, 0)),
        ),
        compiler_params=pltpu.CompilerParams(
            dimension_semantics=("parallel",),
        ),
        cost_estimate=cost,
    )(*flat_args)


def init_params(key):
    """Deterministic init; shapes mirror the PyTorch module (transposed weights)."""
    dims = [(HIDDEN, HIDDEN)] * 5 + [(HIDDEN, OUT)]
    params = []
    for (d_in, d_out) in dims:
        key, kw, kb = jax.random.split(key, 3)
        bound = 1.0 / jnp.sqrt(d_in)
        w = jax.random.uniform(kw, (d_in, d_out), jnp.float32, -bound, bound)
        b = jax.random.uniform(kb, (1, d_out), jnp.float32, -bound, bound)
        params.append((w, b))
    return params


def reference(x, params):
    """Pure-JAX forward with bf16-quantized weights (f32 activations)."""
    h = x
    for (w, b) in params[:-1]:
        wq = w.astype(jnp.bfloat16).astype(jnp.float32)
        h = jnp.maximum(h @ wq + b, 0.0)
    w, b = params[-1]
    wq = w.astype(jnp.bfloat16).astype(jnp.float32)
    return jax.nn.sigmoid(h @ wq + b)


if __name__ == "__main__":
    key = jax.random.PRNGKey(0)
    key, kx = jax.random.split(key)
    params = init_params(key)

    # Primary small test (tile divides the batch exactly).
    B = 8
    x = jax.random.normal(kx, (B, HIDDEN), jnp.float32)
    out = jax.block_until_ready(deep_mlp(x, params))
    ref = reference(x, params)
    assert out.shape == (B, OUT), out.shape
    # bf16 activations in-kernel + approx reciprocal vs f32-activation reference.
    assert jnp.allclose(out, ref, atol=2.5e-2, rtol=0.0), (out, ref)

    # Second test: batch that does not divide the tile (masked tail block path).
    B2 = 24
    x2 = jax.random.normal(jax.random.PRNGKey(1), (B2, HIDDEN), jnp.float32)
    out2 = jax.block_until_ready(deep_mlp(x2, params))
    ref2 = reference(x2, params)
    assert out2.shape == (B2, OUT), out2.shape
    assert jnp.allclose(out2, ref2, atol=2.5e-2, rtol=0.0), (out2, ref2)

    print("KERNEL_OK")
</pallas_src>

<mosaic_0001>
module attributes {stable_mosaic.version = 11 : i64} {
  func.func @deep_mlp_kernel(%arg0: i32, %arg1: memref<8x100xf32, #tpu.memory_space<vmem>>, %arg2: memref<100x128xbf16, #tpu.memory_space<vmem>>, %arg3: memref<1x128xf32, #tpu.memory_space<vmem>>, %arg4: memref<128x128xbf16, #tpu.memory_space<vmem>>, %arg5: memref<1x128xf32, #tpu.memory_space<vmem>>, %arg6: memref<128x128xbf16, #tpu.memory_space<vmem>>, %arg7: memref<1x128xf32, #tpu.memory_space<vmem>>, %arg8: memref<128x128xbf16, #tpu.memory_space<vmem>>, %arg9: memref<1x128xf32, #tpu.memory_space<vmem>>, %arg10: memref<128x128xbf16, #tpu.memory_space<vmem>>, %arg11: memref<1x128xf32, #tpu.memory_space<vmem>>, %arg12: memref<1x128xbf16, #tpu.memory_space<vmem>>, %arg13: memref<1x1xf32, #tpu.memory_space<vmem>>, %arg14: memref<8x1xf32, #tpu.memory_space<vmem>>) attributes {dimension_semantics = [#tpu.dimension_semantics<parallel>], iteration_bounds = array<i64: 1>, scalar_prefetch = 0 : i64, scratch_operands = 0 : i64, tpu.core_type = #tpu.core_type<tc>, window_params = [{transform_indices = @transform_0, window_bounds = array<i64: 8, 100>}, {pipeline_mode = #tpu.pipeline_mode<synchronous>, transform_indices = @transform_1, window_bounds = array<i64: 100, 128>}, {pipeline_mode = #tpu.pipeline_mode<synchronous>, transform_indices = @transform_2, window_bounds = array<i64: 1, 128>}, {pipeline_mode = #tpu.pipeline_mode<synchronous>, transform_indices = @transform_3, window_bounds = array<i64: 128, 128>}, {pipeline_mode = #tpu.pipeline_mode<synchronous>, transform_indices = @transform_4, window_bounds = array<i64: 1, 128>}, {pipeline_mode = #tpu.pipeline_mode<synchronous>, transform_indices = @transform_5, window_bounds = array<i64: 128, 128>}, {pipeline_mode = #tpu.pipeline_mode<synchronous>, transform_indices = @transform_6, window_bounds = array<i64: 1, 128>}, {pipeline_mode = #tpu.pipeline_mode<synchronous>, transform_indices = @transform_7, window_bounds = array<i64: 128, 128>}, {pipeline_mode = #tpu.pipeline_mode<synchronous>, transform_indices = @transform_8, window_bounds = array<i64: 1, 128>}, {pipeline_mode = #tpu.pipeline_mode<synchronous>, transform_indices = @transform_9, window_bounds = array<i64: 128, 128>}, {pipeline_mode = #tpu.pipeline_mode<synchronous>, transform_indices = @transform_10, window_bounds = array<i64: 1, 128>}, {pipeline_mode = #tpu.pipeline_mode<synchronous>, transform_indices = @transform_11, window_bounds = array<i64: 1, 128>}, {pipeline_mode = #tpu.pipeline_mode<synchronous>, transform_indices = @transform_12, window_bounds = array<i64: 1, 1>}, {transform_indices = @transform_13, window_bounds = array<i64: 8, 1>}]} {
    %c0 = arith.constant 0 : index
    %c0_0 = arith.constant 0 : index
    %0 = vector.load %arg1[%c0, %c0_0] : memref<8x100xf32, #tpu.memory_space<vmem>>, vector<8x100xf32>
    %1 = arith.truncf %0 : vector<8x100xf32> to vector<8x100xbf16>
    %c0_1 = arith.constant 0 : index
    %c0_2 = arith.constant 0 : index
    %2 = vector.load %arg2[%c0_1, %c0_2] : memref<100x128xbf16, #tpu.memory_space<vmem>>, vector<100x128xbf16>
    %cst = arith.constant dense<0.000000e+00> : vector<8x128xf32>
    %3 = tpu.matmul %1, %2, %cst {dimension_numbers = #tpu.dot_dimension_numbers<[1], [0], [0], [1], [0, 0, 1, 1], [], []>} : vector<8x100xbf16>, vector<100x128xbf16>, vector<8x128xf32> -> vector<8x128xf32>
    %c0_3 = arith.constant 0 : index
    %c0_4 = arith.constant 0 : index
    %4 = vector.load %arg3[%c0_3, %c0_4] : memref<1x128xf32, #tpu.memory_space<vmem>>, vector<1x128xf32>
    %5 = vector.broadcast %4 : vector<1x128xf32> to vector<8x128xf32>
    %6 = arith.addf %3, %5 : vector<8x128xf32>
    %7 = arith.truncf %6 : vector<8x128xf32> to vector<8x128xbf16>
    %cst_5 = arith.constant 0.000000e+00 : bf16
    %8 = vector.broadcast %cst_5 : bf16 to vector<8x128xbf16>
    %9 = arith.maximumf %7, %8 : vector<8x128xbf16>
    %c0_6 = arith.constant 0 : index
    %c0_7 = arith.constant 0 : index
    %10 = vector.load %arg4[%c0_6, %c0_7] : memref<128x128xbf16, #tpu.memory_space<vmem>>, vector<128x128xbf16>
    %cst_8 = arith.constant dense<0.000000e+00> : vector<8x128xf32>
    %11 = tpu.matmul %9, %10, %cst_8 {dimension_numbers = #tpu.dot_dimension_numbers<[1], [0], [0], [1], [0, 0, 1, 1], [], []>} : vector<8x128xbf16>, vector<128x128xbf16>, vector<8x128xf32> -> vector<8x128xf32>
    %c0_9 = arith.constant 0 : index
    %c0_10 = arith.constant 0 : index
    %12 = vector.load %arg5[%c0_9, %c0_10] : memref<1x128xf32, #tpu.memory_space<vmem>>, vector<1x128xf32>
    %13 = vector.broadcast %12 : vector<1x128xf32> to vector<8x128xf32>
    %14 = arith.addf %11, %13 : vector<8x128xf32>
    %15 = arith.truncf %14 : vector<8x128xf32> to vector<8x128xbf16>
    %cst_11 = arith.constant 0.000000e+00 : bf16
    %16 = vector.broadcast %cst_11 : bf16 to vector<8x128xbf16>
    %17 = arith.maximumf %15, %16 : vector<8x128xbf16>
    %c0_12 = arith.constant 0 : index
    %c0_13 = arith.constant 0 : index
    %18 = vector.load %arg6[%c0_12, %c0_13] : memref<128x128xbf16, #tpu.memory_space<vmem>>, vector<128x128xbf16>
    %cst_14 = arith.constant dense<0.000000e+00> : vector<8x128xf32>
    %19 = tpu.matmul %17, %18, %cst_14 {dimension_numbers = #tpu.dot_dimension_numbers<[1], [0], [0], [1], [0, 0, 1, 1], [], []>} : vector<8x128xbf16>, vector<128x128xbf16>, vector<8x128xf32> -> vector<8x128xf32>
    %c0_15 = arith.constant 0 : index
    %c0_16 = arith.constant 0 : index
    %20 = vector.load %arg7[%c0_15, %c0_16] : memref<1x128xf32, #tpu.memory_space<vmem>>, vector<1x128xf32>
    %21 = vector.broadcast %20 : vector<1x128xf32> to vector<8x128xf32>
    %22 = arith.addf %19, %21 : vector<8x128xf32>
    %23 = arith.truncf %22 : vector<8x128xf32> to vector<8x128xbf16>
    %cst_17 = arith.constant 0.000000e+00 : bf16
    %24 = vector.broadcast %cst_17 : bf16 to vector<8x128xbf16>
    %25 = arith.maximumf %23, %24 : vector<8x128xbf16>
    %c0_18 = arith.constant 0 : index
    %c0_19 = arith.constant 0 : index
    %26 = vector.load %arg8[%c0_18, %c0_19] : memref<128x128xbf16, #tpu.memory_space<vmem>>, vector<128x128xbf16>
    %cst_20 = arith.constant dense<0.000000e+00> : vector<8x128xf32>
    %27 = tpu.matmul %25, %26, %cst_20 {dimension_numbers = #tpu.dot_dimension_numbers<[1], [0], [0], [1], [0, 0, 1, 1], [], []>} : vector<8x128xbf16>, vector<128x128xbf16>, vector<8x128xf32> -> vector<8x128xf32>
    %c0_21 = arith.constant 0 : index
    %c0_22 = arith.constant 0 : index
    %28 = vector.load %arg9[%c0_21, %c0_22] : memref<1x128xf32, #tpu.memory_space<vmem>>, vector<1x128xf32>
    %29 = vector.broadcast %28 : vector<1x128xf32> to vector<8x128xf32>
    %30 = arith.addf %27, %29 : vector<8x128xf32>
    %31 = arith.truncf %30 : vector<8x128xf32> to vector<8x128xbf16>
    %cst_23 = arith.constant 0.000000e+00 : bf16
    %32 = vector.broadcast %cst_23 : bf16 to vector<8x128xbf16>
    %33 = arith.maximumf %31, %32 : vector<8x128xbf16>
    %c0_24 = arith.constant 0 : index
    %c0_25 = arith.constant 0 : index
    %34 = vector.load %arg10[%c0_24, %c0_25] : memref<128x128xbf16, #tpu.memory_space<vmem>>, vector<128x128xbf16>
    %cst_26 = arith.constant dense<0.000000e+00> : vector<8x128xf32>
    %35 = tpu.matmul %33, %34, %cst_26 {dimension_numbers = #tpu.dot_dimension_numbers<[1], [0], [0], [1], [0, 0, 1, 1], [], []>} : vector<8x128xbf16>, vector<128x128xbf16>, vector<8x128xf32> -> vector<8x128xf32>
    %c0_27 = arith.constant 0 : index
    %c0_28 = arith.constant 0 : index
    %36 = vector.load %arg11[%c0_27, %c0_28] : memref<1x128xf32, #tpu.memory_space<vmem>>, vector<1x128xf32>
    %37 = vector.broadcast %36 : vector<1x128xf32> to vector<8x128xf32>
    %38 = arith.addf %35, %37 : vector<8x128xf32>
    %39 = arith.truncf %38 : vector<8x128xf32> to vector<8x128xbf16>
    %cst_29 = arith.constant 0.000000e+00 : bf16
    %40 = vector.broadcast %cst_29 : bf16 to vector<8x128xbf16>
    %41 = arith.maximumf %39, %40 : vector<8x128xbf16>
    %42 = arith.extf %41 : vector<8x128xbf16> to vector<8x128xf32>
    %c0_30 = arith.constant 0 : index
    %c0_31 = arith.constant 0 : index
    %43 = vector.load %arg12[%c0_30, %c0_31] : memref<1x128xbf16, #tpu.memory_space<vmem>>, vector<1x128xbf16>
    %44 = arith.extf %43 : vector<1x128xbf16> to vector<1x128xf32>
    %45 = vector.broadcast %44 : vector<1x128xf32> to vector<8x128xf32>
    %46 = arith.mulf %42, %45 : vector<8x128xf32>
    %cst_32 = arith.constant dense<0.000000e+00> : vector<8xf32>
    %47 = vector.multi_reduction <add>, %46, %cst_32 [1] : vector<8x128xf32> to vector<8xf32>
    %48 = vector.shape_cast %47 : vector<8xf32> to vector<8x1xf32>
    %c0_33 = arith.constant 0 : index
    %c0_34 = arith.constant 0 : index
    %49 = vector.load %arg13[%c0_33, %c0_34] : memref<1x1xf32, #tpu.memory_space<vmem>>, vector<1x1xf32>
    %50 = vector.broadcast %49 : vector<1x1xf32> to vector<8x1xf32>
    %51 = arith.addf %48, %50 : vector<8x1xf32>
    %cst_35 = arith.constant 0.000000e+00 : f32
    %52 = vector.broadcast %cst_35 : f32 to vector<8x1xf32>
    %53 = arith.subf %52, %51 : vector<8x1xf32>
    %54 = math.exp %53 : vector<8x1xf32>
    %cst_36 = arith.constant 1.000000e+00 : f32
    %55 = vector.broadcast %cst_36 : f32 to vector<8x1xf32>
    %56 = arith.addf %55, %54 : vector<8x1xf32>
    %57 = tpu.reciprocal %56 {approx = true} : vector<8x1xf32> -> vector<8x1xf32>
    %c0_37 = arith.constant 0 : index
    %c0_38 = arith.constant 0 : index
    %58 = vector.load %arg14[%c0_37, %c0_38] : memref<8x1xf32, #tpu.memory_space<vmem>>, vector<8x1xf32>
    tpu.vector_store %arg14[%c0_37, %c0_38], %57 {strides = array<i32>} : memref<8x1xf32, #tpu.memory_space<vmem>>, vector<8x1xf32>,
    return
  }
  func.func @transform_0(%arg0: i32) -> (i32, i32) {
    %c0_i32 = arith.constant 0 : i32
    %c0_i32_0 = arith.constant 0 : i32
    return %arg0, %c0_i32 : i32, i32
  }
  func.func @transform_1(%arg0: i32) -> (i32, i32) {
    %c0_i32 = arith.constant 0 : i32
    %c0_i32_0 = arith.constant 0 : i32
    %c0_i32_1 = arith.constant 0 : i32
    return %c0_i32, %c0_i32_0 : i32, i32
  }
  func.func @transform_2(%arg0: i32) -> (i32, i32) {
    %c0_i32 = arith.constant 0 : i32
    %c0_i32_0 = arith.constant 0 : i32
    %c0_i32_1 = arith.constant 0 : i32
    return %c0_i32, %c0_i32_0 : i32, i32
  }
  func.func @transform_3(%arg0: i32) -> (i32, i32) {
    %c0_i32 = arith.constant 0 : i32
    %c0_i32_0 = arith.constant 0 : i32
    %c0_i32_1 = arith.constant 0 : i32
    return %c0_i32, %c0_i32_0 : i32, i32
  }
  func.func @transform_4(%arg0: i32) -> (i32, i32) {
    %c0_i32 = arith.constant 0 : i32
    %c0_i32_0 = arith.constant 0 : i32
    %c0_i32_1 = arith.constant 0 : i32
    return %c0_i32, %c0_i32_0 : i32, i32
  }
  func.func @transform_5(%arg0: i32) -> (i32, i32) {
    %c0_i32 = arith.constant 0 : i32
    %c0_i32_0 = arith.constant 0 : i32
    %c0_i32_1 = arith.constant 0 : i32
    return %c0_i32, %c0_i32_0 : i32, i32
  }
  func.func @transform_6(%arg0: i32) -> (i32, i32) {
    %c0_i32 = arith.constant 0 : i32
    %c0_i32_0 = arith.constant 0 : i32
    %c0_i32_1 = arith.constant 0 : i32
    return %c0_i32, %c0_i32_0 : i32, i32
  }
  func.func @transform_7(%arg0: i32) -> (i32, i32) {
    %c0_i32 = arith.constant 0 : i32
    %c0_i32_0 = arith.constant 0 : i32
    %c0_i32_1 = arith.constant 0 : i32
    return %c0_i32, %c0_i32_0 : i32, i32
  }
  func.func @transform_8(%arg0: i32) -> (i32, i32) {
    %c0_i32 = arith.constant 0 : i32
    %c0_i32_0 = arith.constant 0 : i32
    %c0_i32_1 = arith.constant 0 : i32
    return %c0_i32, %c0_i32_0 : i32, i32
  }
  func.func @transform_9(%arg0: i32) -> (i32, i32) {
    %c0_i32 = arith.constant 0 : i32
    %c0_i32_0 = arith.constant 0 : i32
    %c0_i32_1 = arith.constant 0 : i32
    return %c0_i32, %c0_i32_0 : i32, i32
  }
  func.func @transform_10(%arg0: i32) -> (i32, i32) {
    %c0_i32 = arith.constant 0 : i32
    %c0_i32_0 = arith.constant 0 : i32
    %c0_i32_1 = arith.constant 0 : i32
    return %c0_i32, %c0_i32_0 : i32, i32
  }
  func.func @transform_11(%arg0: i32) -> (i32, i32) {
    %c0_i32 = arith.constant 0 : i32
    %c0_i32_0 = arith.constant 0 : i32
    %c0_i32_1 = arith.constant 0 : i32
    return %c0_i32, %c0_i32_0 : i32, i32
  }
  func.func @transform_12(%arg0: i32) -> (i32, i32) {
    %c0_i32 = arith.constant 0 : i32
    %c0_i32_0 = arith.constant 0 : i32
    %c0_i32_1 = arith.constant 0 : i32
    return %c0_i32, %c0_i32_0 : i32, i32
  }
  func.func @transform_13(%arg0: i32) -> (i32, i32) {
    %c0_i32 = arith.constant 0 : i32
    %c0_i32_0 = arith.constant 0 : i32
    return %arg0, %c0_i32 : i32, i32
  }
}

</mosaic_0001>

<llo_original>
// kernel: tpu_custom_call.1
$region0: #{tpu_custom_call.1}
  #allocation0 [shape = 'u32[]', space=smem, size = 0x4, offset = 0x4, fixed_abs, tag = 'smem constant byte address 0x4 - core index']
  #allocation1 [shape = 'u32[72,128]{1,0:T(1,128)}', space=vmem, size = 0x9000, scoped, tag = 'internal scratch']
  #allocation2 [shape = 'f32[1,1]{1,0:T(1,128)S(1)}', space=vmem, size = 0x200, scoped, tag = 'scoped memory for tpu_custom_call.1']
  %s0 = inlined_call_operand.hbm [shape: f32[8,100], index: 0, kind: input, shape index: {}]
  %s1 = inlined_call_operand.hbm [shape: bf16[100,128], index: 1, kind: input, shape index: {}]
  %s2 = inlined_call_operand.vmem [shape: f32[1,128], index: 2, kind: input, shape index: {}]
  %s3 = inlined_call_operand.hbm [shape: bf16[128,128], index: 3, kind: input, shape index: {}]
  %s4 = inlined_call_operand.vmem [shape: f32[1,128], index: 4, kind: input, shape index: {}]
  %s5 = inlined_call_operand.hbm [shape: bf16[128,128], index: 5, kind: input, shape index: {}]
  %s6 = inlined_call_operand.vmem [shape: f32[1,128], index: 6, kind: input, shape index: {}]
  %s7 = inlined_call_operand.hbm [shape: bf16[128,128], index: 7, kind: input, shape index: {}]
  %s8 = inlined_call_operand.vmem [shape: f32[1,128], index: 8, kind: input, shape index: {}]
  %s9 = inlined_call_operand.hbm [shape: bf16[128,128], index: 9, kind: input, shape index: {}]
  %s10 = inlined_call_operand.vmem [shape: f32[1,128], index: 10, kind: input, shape index: {}]
  %s11 = inlined_call_operand.vmem [shape: bf16[1,128], index: 11, kind: input, shape index: {}]
  %s12 = inlined_call_operand.<no memory space> [shape: f32[1,1], index: 12, kind: input, shape index: {}]
  %s13 = inlined_call_operand.vmem [shape: f32[8,1], index: 13, kind: output, shape index: {}]
  %s14 = sld [smem:[#allocation0]]
  $region86: #{tpu_custom_call.1} parent=0
    _
  %s16 = ssub.s32 1, %s14
  %s17 = scalar_select 0, %s16, %s14
  %v18 = vstv %s12
  %19 = vst [vmem:[#allocation2] sm:$0x1] %v18
  $region1: #{tpu_custom_call.1} parent=0
    #allocation3 [shape = 'u8[4096]{0}', space=vmem, size = 0x1000, scoped, tag = 'input window, operand 0, single buffered']
    #allocation4 [shape = 's32[1]{0}', space=sflag, size = 0x4, scoped, tag = 'scoped memory for tpu_custom_call.1']
    #allocation5 [shape = 'u8[26624]{0}', space=vmem, size = 0x6800, scoped, tag = 'input window, operand 1, single buffered']
    #allocation6 [shape = 's32[1]{0}', space=sflag, size = 0x4, scoped, tag = 'scoped memory for tpu_custom_call.1']
    #allocation7 [shape = 'u8[32768]{0}', space=vmem, size = 0x8000, scoped, tag = 'input window, operand 3, single buffered']
    #allocation8 [shape = 'u8[32768]{0}', space=vmem, size = 0x8000, scoped, tag = 'input window, operand 5, single buffered']
    #allocation9 [shape = 's32[1]{0}', space=sflag, size = 0x4, scoped, tag = 'scoped memory for tpu_custom_call.1']
    #allocation10 [shape = 'u8[32768]{0}', space=vmem, size = 0x8000, scoped, tag = 'input window, operand 7, single buffered']
    #allocation11 [shape = 'u8[32768]{0}', space=vmem, size = 0x8000, scoped, tag = 'input window, operand 9, single buffered']
    #allocation12 [shape = 's32[1]{0}', space=sflag, size = 0x4, scoped, tag = 'scoped memory for tpu_custom_call.1']
    %20 = vsyncpa [#allocation4], 0
    %21 = vsyncpa [#allocation6], 0
    %22 = vsyncpa [#allocation9], 0
    %23 = vsyncpa [#allocation12], 0
    // Predicated region
    $region2: #{tpu_custom_call.1} parent=1 // pred_check
      _
    $region3: #{tpu_custom_call.1} parent=1 // pred_check_branch
      %25 = sbr.rel (0) target = $region5
    $region4: #{tpu_custom_call.1} parent=1 // pred_region
      %27 = vsyncadd [#allocation4], 0
      %s29 = sshll.u32 %s0, 4
      %s30 = int_to_ptr.hbm [resolvable:$true] %s29
      %s31 = sshll.u32 [#allocation3], 4
      %s32 = int_to_ptr.vmem [resolvable:$true] %s31
      %34 = dma.hbm_to_vmem [thread:$0]  %s30, 128, %s32, [#allocation4]
    $region5: #{tpu_custom_call.1} parent=1 // pred_fallthru
      _
    // Predicated region
    $region6: #{tpu_custom_call.1} parent=1 // pred_check
      _
    $region7: #{tpu_custom_call.1} parent=1 // pred_check_branch
      %36 = sbr.rel (0) target = $region9
    $region8: #{tpu_custom_call.1} parent=1 // pred_region
      %38 = vsyncadd [#allocation6], 0
      %s39 = sshll.u32 %s1, 4
      %s40 = int_to_ptr.hbm [resolvable:$true] %s39
      %s41 = sshll.u32 [#allocation5], 4
      %s42 = int_to_ptr.vmem [resolvable:$true] %s41
      %47 = dma.hbm_to_vmem [thread:$0]  %s40, 832, %s42, [#allocation6], 64, 64, 4
    $region9: #{tpu_custom_call.1} parent=1 // pred_fallthru
      _
    // Predicated region
    $region10: #{tpu_custom_call.1} parent=1 // pred_check
      _
    $region11: #{tpu_custom_call.1} parent=1 // pred_check_branch
      %49 = sbr.rel (0) target = $region13
    $region12: #{tpu_custom_call.1} parent=1 // pred_region
      _
    $region13: #{tpu_custom_call.1} parent=1 // pred_fallthru
      _
    // Predicated region
    $region14: #{tpu_custom_call.1} parent=1 // pred_check
      _
    $region15: #{tpu_custom_call.1} parent=1 // pred_check_branch
      %51 = sbr.rel (0) target = $region17
    $region16: #{tpu_custom_call.1} parent=1 // pred_region
      %53 = vsyncadd [#allocation6], 0
      %s54 = sshll.u32 %s3, 4
      %s55 = int_to_ptr.hbm [resolvable:$true] %s54
      %s56 = sshll.u32 [#allocation7], 4
      %s57 = int_to_ptr.vmem [resolvable:$true] %s56
      %62 = dma.hbm_to_vmem [thread:$0]  %s55, 1024, %s57, [#allocation6], 64, 64, 4
    $region17: #{tpu_custom_call.1} parent=1 // pred_fallthru
      _
    // Predicated region
    $region18: #{tpu_custom_call.1} parent=1 // pred_check
      _
    $region19: #{tpu_custom_call.1} parent=1 // pred_check_branch
      %64 = sbr.rel (0) target = $region21
    $region20: #{tpu_custom_call.1} parent=1 // pred_region
      _
    $region21: #{tpu_custom_call.1} parent=1 // pred_fallthru
      _
    // Predicated region
    $region22: #{tpu_custom_call.1} parent=1 // pred_check
      _
    $region23: #{tpu_custom_call.1} parent=1 // pred_check_branch
      %66 = sbr.rel (0) target = $region25
    $region24: #{tpu_custom_call.1} parent=1 // pred_region
      %68 = vsyncadd [#allocation9], 0
      %s69 = sshll.u32 %s5, 4
      %s70 = int_to_ptr.hbm [resolvable:$true] %s69
      %s71 = sshll.u32 [#allocation8], 4
      %s72 = int_to_ptr.vmem [resolvable:$true] %s71
      %77 = dma.hbm_to_vmem [thread:$0]  %s70, 1024, %s72, [#allocation9], 64, 64, 4
    $region25: #{tpu_custom_call.1} parent=1 // pred_fallthru
      _
    // Predicated region
    $region26: #{tpu_custom_call.1} parent=1 // pred_check
      _
    $region27: #{tpu_custom_call.1} parent=1 // pred_check_branch
      %79 = sbr.rel (0) target = $region29
    $region28: #{tpu_custom_call.1} parent=1 // pred_region
      _
    $region29: #{tpu_custom_call.1} parent=1 // pred_fallthru
      _
    // Predicated region
    $region30: #{tpu_custom_call.1} parent=1 // pred_check
      _
    $region31: #{tpu_custom_call.1} parent=1 // pred_check_branch
      %81 = sbr.rel (0) target = $region33
    $region32: #{tpu_custom_call.1} parent=1 // pred_region
      %83 = vsyncadd [#allocation9], 0
      %s84 = sshll.u32 %s7, 4
      %s85 = int_to_ptr.hbm [resolvable:$true] %s84
      %s86 = sshll.u32 [#allocation10], 4
      %s87 = int_to_ptr.vmem [resolvable:$true] %s86
      %92 = dma.hbm_to_vmem [thread:$0]  %s85, 1024, %s87, [#allocation9], 64, 64, 4
    $region33: #{tpu_custom_call.1} parent=1 // pred_fallthru
      _
    // Predicated region
    $region34: #{tpu_custom_call.1} parent=1 // pred_check
      _
    $region35: #{tpu_custom_call.1} parent=1 // pred_check_branch
      %94 = sbr.rel (0) target = $region37
    $region36: #{tpu_custom_call.1} parent=1 // pred_region
      _
    $region37: #{tpu_custom_call.1} parent=1 // pred_fallthru
      _
    // Predicated region
    $region38: #{tpu_custom_call.1} parent=1 // pred_check
      _
    $region39: #{tpu_custom_call.1} parent=1 // pred_check_branch
      %96 = sbr.rel (0) target = $region41
    $region40: #{tpu_custom_call.1} parent=1 // pred_region
      %98 = vsyncadd [#allocation12], 0
      %s99 = sshll.u32 %s9, 4
      %s100 = int_to_ptr.hbm [resolvable:$true] %s99
      %s101 = sshll.u32 [#allocation11], 4
      %s102 = int_to_ptr.vmem [resolvable:$true] %s101
      %107 = dma.hbm_to_vmem [thread:$0]  %s100, 1024, %s102, [#allocation12], 64, 64, 4
    $region41: #{tpu_custom_call.1} parent=1 // pred_fallthru
      _
    // Predicated region
    $region42: #{tpu_custom_call.1} parent=1 // pred_check
      _
    $region43: #{tpu_custom_call.1} parent=1 // pred_check_branch
      %109 = sbr.rel (0) target = $region45
    $region44: #{tpu_custom_call.1} parent=1 // pred_region
      _
    $region45: #{tpu_custom_call.1} parent=1 // pred_fallthru
      _
    // Predicated region
    $region46: #{tpu_custom_call.1} parent=1 // pred_check
      _
    $region47: #{tpu_custom_call.1} parent=1 // pred_check_branch
      %111 = sbr.rel (0) target = $region49
    $region48: #{tpu_custom_call.1} parent=1 // pred_region
      _
    $region49: #{tpu_custom_call.1} parent=1 // pred_fallthru
      _
    // Predicated region
    $region50: #{tpu_custom_call.1} parent=1 // pred_check
      _
    $region51: #{tpu_custom_call.1} parent=1 // pred_check_branch
      %113 = sbr.rel (0) target = $region53
    $region52: #{tpu_custom_call.1} parent=1 // pred_region
      _
    $region53: #{tpu_custom_call.1} parent=1 // pred_fallthru
      _
    // Predicated region
    $region54: #{tpu_custom_call.1} parent=1 // pred_check
      _
    $region55: #{tpu_custom_call.1} parent=1 // pred_check_branch
      %115 = sbr.rel (0) target = $region57
    $region56: #{tpu_custom_call.1} parent=1 // pred_region
      %117 = dma.done [#allocation4], 128
    $region57: #{tpu_custom_call.1} parent=1 // pred_fallthru
      _
    // Predicated region
    $region58: #{tpu_custom_call.1} parent=1 // pred_check
      _
    $region59: #{tpu_custom_call.1} parent=1 // pred_check_branch
      %119 = sbr.rel (0) target = $region61
    $region60: #{tpu_custom_call.1} parent=1 // pred_region
      %121 = dma.done [#allocation6], 832
    $region61: #{tpu_custom_call.1} parent=1 // pred_fallthru
      _
    // Predicated region
    $region62: #{tpu_custom_call.1} parent=1 // pred_check
      _
    $region63: #{tpu_custom_call.1} parent=1 // pred_check_branch
      %123 = sbr.rel (0) target = $region65
    $region64: #{tpu_custom_call.1} parent=1 // pred_region
      %125 = dma.done [#allocation6], 1024
    $region65: #{tpu_custom_call.1} parent=1 // pred_fallthru
      _
    // Predicated region
    $region66: #{tpu_custom_call.1} parent=1 // pred_check
      _
    $region67: #{tpu_custom_call.1} parent=1 // pred_check_branch
      %127 = sbr.rel (0) target = $region69
    $region68: #{tpu_custom_call.1} parent=1 // pred_region
      %129 = dma.done [#allocation9], 1024
    $region69: #{tpu_custom_call.1} parent=1 // pred_fallthru
      _
    // Predicated region
    $region70: #{tpu_custom_call.1} parent=1 // pred_check
      _
    $region71: #{tpu_custom_call.1} parent=1 // pred_check_branch
      %131 = sbr.rel (0) target = $region73
    $region72: #{tpu_custom_call.1} parent=1 // pred_region
      %133 = dma.done [#allocation9], 1024
    $region73: #{tpu_custom_call.1} parent=1 // pred_fallthru
      _
    // Predicated region
    $region74: #{tpu_custom_call.1} parent=1 // pred_check
      _
    $region75: #{tpu_custom_call.1} parent=1 // pred_check_branch
      %135 = sbr.rel (0) target = $region77
    $region76: #{tpu_custom_call.1} parent=1 // pred_region
      %137 = dma.done [#allocation12], 1024
    $region77: #{tpu_custom_call.1} parent=1 // pred_fallthru
      _
    %v139 = vld [vmem:[#allocation3] sm:$0xff]
    %v140 = vpack.c.bf16 %v139, %v139
    %v141 = vld [vmem:[#allocation5] sm:$0xf]
    %v142 = vld [vmem:[#allocation5 + $0x4] sm:$0xf]
    %v143 = vld [vmem:[#allocation5 + $0x8] sm:$0xf]
    %v144 = vld [vmem:[#allocation5 + $0xc] sm:$0xf]
    %v145 = vld [vmem:[#allocation5 + $0x10] sm:$0xf]
    %v146 = vld [vmem:[#allocation5 + $0x14] sm:$0xf]
    %v147 = vld [vmem:[#allocation5 + $0x18] sm:$0xf]
    %v148 = vld [vmem:[#allocation5 + $0x1c] sm:$0xf]
    %v149 = vld [vmem:[#allocation5 + $0x20] sm:$0xf]
    %v150 = vld [vmem:[#allocation5 + $0x24] sm:$0xf]
    %v151 = vld [vmem:[#allocation5 + $0x28] sm:$0xf]
    %v152 = vld [vmem:[#allocation5 + $0x2c] sm:$0xf]
    %v153 = vld [vmem:[#allocation5 + $0x30] sm:$0x3]
    %v154 = vld [vmem:[%s2] sm:$0x1]
    %v156 = vperm.slane %v154, 0
    %v171 = vunpack.c.l.b16 %v141
    %v172 = vunpack.c.l.b16 %v142
    %v173 = vunpack.c.l.b16 %v143
    %v174 = vunpack.c.l.b16 %v144
    %v175 = vunpack.c.l.b16 %v145
    %v176 = vunpack.c.l.b16 %v146
    %v177 = vunpack.c.l.b16 %v147
    %v178 = vunpack.c.l.b16 %v148
    %v179 = vunpack.c.l.b16 %v149
    %v180 = vunpack.c.l.b16 %v150
    %v181 = vunpack.c.l.b16 %v151
    %v182 = vunpack.c.l.b16 %v152
    %v183 = vunpack.c.l.b16 %v153
    %v184 = vpack.c.b16 %v172, %v171
    %v185 = vpack.c.b16 %v174, %v173
    %v186 = vpack.c.b16 %v176, %v175
    %v187 = vpack.c.b16 %v178, %v177
    %v188 = vpack.c.b16 %v180, %v179
    %v189 = vpack.c.b16 %v182, %v181
    %v190 = vpack.c.b16 %v183, %v183
    %vm197 = vcmask 818176
    %v199 = vsel %vm197, %v140, 0
    %vm201 = vcmask 1041408
    %v203 = vsel %vm201, %v190, 0
    %205 = vmatpush.bf16.msra.mxu0 0
    %206 = vmatpush.bf16.msra.mxu0 %v203
    %207 = vmatpush.bf16.msra.mxu0 %v189
    %208 = vmatpush.bf16.msra.mxu0 %v188
    %209 = vmatpush.bf16.msra.mxu0 %v187
    %210 = vmatpush.bf16.msra.mxu0 %v186
    %211 = vmatpush.bf16.msra.mxu0 %v185
    %212 = vmatpush.bf16.msra.mxu0 %v184
    %213 = vmatmul.bf16.gmra.mxu0 %v199
    %v214 = vpop.f32.mrf.mxu0
    %v215 = vadd.f32 %v156, %v214
    %v216 = vpop.f32.mrf.mxu0
    %217 = vdwg.mxu0
    %v218 = vpack.c.bf16 %v215, %v215
    %v219 = vunpack.c.l.bf16 %v218
    %v220 = vmax.f32 %v219, 0.0
    %v221 = vpack.c.bf16 %v220, %v220
    %v222 = vld [vmem:[#allocation7] sm:$0xf]
    %v223 = vld [vmem:[#allocation7 + $0x4] sm:$0xf]
    %v224 = vld [vmem:[#allocation7 + $0x8] sm:$0xf]
    %v225 = vld [vmem:[#allocation7 + $0xc] sm:$0xf]
    %v226 = vld [vmem:[#allocation7 + $0x10] sm:$0xf]
    %v227 = vld [vmem:[#allocation7 + $0x14] sm:$0xf]
    %v228 = vld [vmem:[#allocation7 + $0x18] sm:$0xf]
    %v229 = vld [vmem:[#allocation7 + $0x1c] sm:$0xf]
    %v230 = vld [vmem:[#allocation7 + $0x20] sm:$0xf]
    %v231 = vld [vmem:[#allocation7 + $0x24] sm:$0xf]
    %v232 = vld [vmem:[#allocation7 + $0x28] sm:$0xf]
    %v233 = vld [vmem:[#allocation7 + $0x2c] sm:$0xf]
    %v234 = vld [vmem:[#allocation7 + $0x30] sm:$0xf]
    %v235 = vld [vmem:[#allocation7 + $0x34] sm:$0xf]
    %v236 = vld [vmem:[#allocation7 + $0x38] sm:$0xf]
    %v237 = vld [vmem:[#allocation7 + $0x3c] sm:$0xf]
    %v238 = vld [vmem:[%s4] sm:$0x1]
    %v240 = vperm.slane %v238, 0
    %v258 = vunpack.c.l.b16 %v222
    %v259 = vunpack.c.l.b16 %v223
    %v260 = vunpack.c.l.b16 %v224
    %v261 = vunpack.c.l.b16 %v225
    %v262 = vunpack.c.l.b16 %v226
    %v263 = vunpack.c.l.b16 %v227
    %v264 = vunpack.c.l.b16 %v228
    %v265 = vunpack.c.l.b16 %v229
    %v266 = vunpack.c.l.b16 %v230
    %v267 = vunpack.c.l.b16 %v231
    %v268 = vunpack.c.l.b16 %v232
    %v269 = vunpack.c.l.b16 %v233
    %v270 = vunpack.c.l.b16 %v234
    %v271 = vunpack.c.l.b16 %v235
    %v272 = vunpack.c.l.b16 %v236
    %v273 = vunpack.c.l.b16 %v237
    %v274 = vpack.c.b16 %v259, %v258
    %v275 = vpack.c.b16 %v261, %v260
    %v276 = vpack.c.b16 %v263, %v262
    %v277 = vpack.c.b16 %v265, %v264
    %v278 = vpack.c.b16 %v267, %v266
    %v279 = vpack.c.b16 %v269, %v268
    %v280 = vpack.c.b16 %v271, %v270
    %v281 = vpack.c.b16 %v273, %v272
    %290 = vmatpush.bf16.msra.mxu0 %v281
    %291 = vmatpush.bf16.msra.mxu0 %v280
    %292 = vmatpush.bf16.msra.mxu0 %v279
    %293 = vmatpush.bf16.msra.mxu0 %v278
    %294 = vmatpush.bf16.msra.mxu0 %v277
    %295 = vmatpush.bf16.msra.mxu0 %v276
    %296 = vmatpush.bf16.msra.mxu0 %v275
    %297 = vmatpush.bf16.msra.mxu0 %v274
    %298 = vmatmul.bf16.gmra.mxu0 %v221
    %v299 = vpop.f32.mrf.mxu0
    %v300 = vadd.f32 %v240, %v299
    %v301 = vpop.f32.mrf.mxu0
    %302 = vdwg.mxu0
    %v303 = vpack.c.bf16 %v300, %v300
    %v304 = vunpack.c.l.bf16 %v303
    %v305 = vmax.f32 %v304, 0.0
    %v306 = vpack.c.bf16 %v305, %v305
    %v307 = vld [vmem:[#allocation8] sm:$0xf]
    %v308 = vld [vmem:[#allocation8 + $0x4] sm:$0xf]
    %v309 = vld [vmem:[#allocation8 + $0x8] sm:$0xf]
    %v310 = vld [vmem:[#allocation8 + $0xc] sm:$0xf]
    %v311 = vld [vmem:[#allocation8 + $0x10] sm:$0xf]
    %v312 = vld [vmem:[#allocation8 + $0x14] sm:$0xf]
    %v313 = vld [vmem:[#allocation8 + $0x18] sm:$0xf]
    %v314 = vld [vmem:[#allocation8 + $0x1c] sm:$0xf]
    %v315 = vld [vmem:[#allocation8 + $0x20] sm:$0xf]
    %v316 = vld [vmem:[#allocation8 + $0x24] sm:$0xf]
    %v317 = vld [vmem:[#allocation8 + $0x28] sm:$0xf]
    %v318 = vld [vmem:[#allocation8 + $0x2c] sm:$0xf]
    %v319 = vld [vmem:[#allocation8 + $0x30] sm:$0xf]
    %v320 = vld [vmem:[#allocation8 + $0x34] sm:$0xf]
    %v321 = vld [vmem:[#allocation8 + $0x38] sm:$0xf]
    %v322 = vld [vmem:[#allocation8 + $0x3c] sm:$0xf]
    %v323 = vld [vmem:[%s6] sm:$0x1]
    %v325 = vperm.slane %v323, 0
    %v343 = vunpack.c.l.b16 %v307
    %v344 = vunpack.c.l.b16 %v308
    %v345 = vunpack.c.l.b16 %v309
    %v346 = vunpack.c.l.b16 %v310
    %v347 = vunpack.c.l.b16 %v311
    %v348 = vunpack.c.l.b16 %v312
    %v349 = vunpack.c.l.b16 %v313
    %v350 = vunpack.c.l.b16 %v314
    %v351 = vunpack.c.l.b16 %v315
    %v352 = vunpack.c.l.b16 %v316
    %v353 = vunpack.c.l.b16 %v317
    %v354 = vunpack.c.l.b16 %v318
    %v355 = vunpack.c.l.b16 %v319
    %v356 = vunpack.c.l.b16 %v320
    %v357 = vunpack.c.l.b16 %v321
    %v358 = vunpack.c.l.b16 %v322
    %v359 = vpack.c.b16 %v344, %v343
    %v360 = vpack.c.b16 %v346, %v345
    %v361 = vpack.c.b16 %v348, %v347
    %v362 = vpack.c.b16 %v350, %v349
    %v363 = vpack.c.b16 %v352, %v351
    %v364 = vpack.c.b16 %v354, %v353
    %v365 = vpack.c.b16 %v356, %v355
    %v366 = vpack.c.b16 %v358, %v357
    %375 = vmatpush.bf16.msra.mxu0 %v366
    %376 = vmatpush.bf16.msra.mxu0 %v365
    %377 = vmatpush.bf16.msra.mxu0 %v364
    %378 = vmatpush.bf16.msra.mxu0 %v363
    %379 = vmatpush.bf16.msra.mxu0 %v362
    %380 = vmatpush.bf16.msra.mxu0 %v361
    %381 = vmatpush.bf16.msra.mxu0 %v360
    %382 = vmatpush.bf16.msra.mxu0 %v359
    %383 = vmatmul.bf16.gmra.mxu0 %v306
    %v384 = vpop.f32.mrf.mxu0
    %v385 = vadd.f32 %v325, %v384
    %v386 = vpop.f32.mrf.mxu0
    %387 = vdwg.mxu0
    %v388 = vpack.c.bf16 %v385, %v385
    %v389 = vunpack.c.l.bf16 %v388
    %v390 = vmax.f32 %v389, 0.0
    %v391 = vpack.c.bf16 %v390, %v390
    %v392 = vld [vmem:[#allocation10] sm:$0xf]
    %v393 = vld [vmem:[#allocation10 + $0x4] sm:$0xf]
    %v394 = vld [vmem:[#allocation10 + $0x8] sm:$0xf]
    %v395 = vld [vmem:[#allocation10 + $0xc] sm:$0xf]
    %v396 = vld [vmem:[#allocation10 + $0x10] sm:$0xf]
    %v397 = vld [vmem:[#allocation10 + $0x14] sm:$0xf]
    %v398 = vld [vmem:[#allocation10 + $0x18] sm:$0xf]
    %v399 = vld [vmem:[#allocation10 + $0x1c] sm:$0xf]
    %v400 = vld [vmem:[#allocation10 + $0x20] sm:$0xf]
    %v401 = vld [vmem:[#allocation10 + $0x24] sm:$0xf]
    %v402 = vld [vmem:[#allocation10 + $0x28] sm:$0xf]
    %v403 = vld [vmem:[#allocation10 + $0x2c] sm:$0xf]
    %v404 = vld [vmem:[#allocation10 + $0x30] sm:$0xf]
    %v405 = vld [vmem:[#allocation10 + $0x34] sm:$0xf]
    %v406 = vld [vmem:[#allocation10 + $0x38] sm:$0xf]
    %v407 = vld [vmem:[#allocation10 + $0x3c] sm:$0xf]
    %v408 = vld [vmem:[%s8] sm:$0x1]
    %v410 = vperm.slane %v408, 0
    %v428 = vunpack.c.l.b16 %v392
    %v429 = vunpack.c.l.b16 %v393
    %v430 = vunpack.c.l.b16 %v394
    %v431 = vunpack.c.l.b16 %v395
    %v432 = vunpack.c.l.b16 %v396
    %v433 = vunpack.c.l.b16 %v397
    %v434 = vunpack.c.l.b16 %v398
    %v435 = vunpack.c.l.b16 %v399
    %v436 = vunpack.c.l.b16 %v400
    %v437 = vunpack.c.l.b16 %v401
    %v438 = vunpack.c.l.b16 %v402
    %v439 = vunpack.c.l.b16 %v403
    %v440 = vunpack.c.l.b16 %v404
    %v441 = vunpack.c.l.b16 %v405
    %v442 = vunpack.c.l.b16 %v406
    %v443 = vunpack.c.l.b16 %v407
    %v444 = vpack.c.b16 %v429, %v428
    %v445 = vpack.c.b16 %v431, %v430
    %v446 = vpack.c.b16 %v433, %v432
    %v447 = vpack.c.b16 %v435, %v434
    %v448 = vpack.c.b16 %v437, %v436
    %v449 = vpack.c.b16 %v439, %v438
    %v450 = vpack.c.b16 %v441, %v440
    %v451 = vpack.c.b16 %v443, %v442
    %460 = vmatpush.bf16.msra.mxu0 %v451
    %461 = vmatpush.bf16.msra.mxu0 %v450
    %462 = vmatpush.bf16.msra.mxu0 %v449
    %463 = vmatpush.bf16.msra.mxu0 %v448
    %464 = vmatpush.bf16.msra.mxu0 %v447
    %465 = vmatpush.bf16.msra.mxu0 %v446
    %466 = vmatpush.bf16.msra.mxu0 %v445
    %467 = vmatpush.bf16.msra.mxu0 %v444
    %468 = vmatmul.bf16.gmra.mxu0 %v391
    %v469 = vpop.f32.mrf.mxu0
    %v470 = vadd.f32 %v410, %v469
    %v471 = vpop.f32.mrf.mxu0
    %472 = vdwg.mxu0
    %v473 = vpack.c.bf16 %v470, %v470
    %v474 = vunpack.c.l.bf16 %v473
    %v475 = vmax.f32 %v474, 0.0
    %v476 = vpack.c.bf16 %v475, %v475
    %v477 = vld [vmem:[#allocation11] sm:$0xf]
    %v478 = vld [vmem:[#allocation11 + $0x4] sm:$0xf]
    %v479 = vld [vmem:[#allocation11 + $0x8] sm:$0xf]
    %v480 = vld [vmem:[#allocation11 + $0xc] sm:$0xf]
    %v481 = vld [vmem:[#allocation11 + $0x10] sm:$0xf]
    %v482 = vld [vmem:[#allocation11 + $0x14] sm:$0xf]
    %v483 = vld [vmem:[#allocation11 + $0x18] sm:$0xf]
    %v484 = vld [vmem:[#allocation11 + $0x1c] sm:$0xf]
    %v485 = vld [vmem:[#allocation11 + $0x20] sm:$0xf]
    %v486 = vld [vmem:[#allocation11 + $0x24] sm:$0xf]
    %v487 = vld [vmem:[#allocation11 + $0x28] sm:$0xf]
    %v488 = vld [vmem:[#allocation11 + $0x2c] sm:$0xf]
    %v489 = vld [vmem:[#allocation11 + $0x30] sm:$0xf]
    %v490 = vld [vmem:[#allocation11 + $0x34] sm:$0xf]
    %v491 = vld [vmem:[#allocation11 + $0x38] sm:$0xf]
    %v492 = vld [vmem:[#allocation11 + $0x3c] sm:$0xf]
    %v493 = vld [vmem:[%s10] sm:$0x1]
    %v495 = vperm.slane %v493, 0
    %v513 = vunpack.c.l.b16 %v477
    %v514 = vunpack.c.l.b16 %v478
    %v515 = vunpack.c.l.b16 %v479
    %v516 = vunpack.c.l.b16 %v480
    %v517 = vunpack.c.l.b16 %v481
    %v518 = vunpack.c.l.b16 %v482
    %v519 = vunpack.c.l.b16 %v483
    %v520 = vunpack.c.l.b16 %v484
    %v521 = vunpack.c.l.b16 %v485
    %v522 = vunpack.c.l.b16 %v486
    %v523 = vunpack.c.l.b16 %v487
    %v524 = vunpack.c.l.b16 %v488
    %v525 = vunpack.c.l.b16 %v489
    %v526 = vunpack.c.l.b16 %v490
    %v527 = vunpack.c.l.b16 %v491
    %v528 = vunpack.c.l.b16 %v492
    %v529 = vpack.c.b16 %v514, %v513
    %v530 = vpack.c.b16 %v516, %v515
    %v531 = vpack.c.b16 %v518, %v517
    %v532 = vpack.c.b16 %v520, %v519
    %v533 = vpack.c.b16 %v522, %v521
    %v534 = vpack.c.b16 %v524, %v523
    %v535 = vpack.c.b16 %v526, %v525
    %v536 = vpack.c.b16 %v528, %v527
    %545 = vmatpush.bf16.msra.mxu0 %v536
    %546 = vmatpush.bf16.msra.mxu0 %v535
    %547 = vmatpush.bf16.msra.mxu0 %v534
    %548 = vmatpush.bf16.msra.mxu0 %v533
    %549 = vmatpush.bf16.msra.mxu0 %v532
    %550 = vmatpush.bf16.msra.mxu0 %v531
    %551 = vmatpush.bf16.msra.mxu0 %v530
    %552 = vmatpush.bf16.msra.mxu0 %v529
    %553 = vmatmul.bf16.gmra.mxu0 %v476
    %v554 = vpop.f32.mrf.mxu0
    %v555 = vadd.f32 %v495, %v554
    %v556 = vpop.f32.mrf.mxu0
    %557 = vdwg.mxu0
    %v558 = vpack.c.bf16 %v555, %v555
    %v559 = vunpack.c.l.bf16 %v558
    %v560 = vmax.f32 %v559, 0.0
    %v561 = vpack.c.bf16 %v560, %v560
    %v562 = vunpack.c.l.bf16 %v561
    %v563 = vld [vmem:[%s11] sm:$0x1]
    %v564 = vunpack.c.l.bf16 %v563
    %v565 = vperm.slane %v564, 0
    %v566 = vmul.f32 %v562, %v565
    %567 = vadd.xlane.f32.xlu0 %v566
    %v568 = vpop.xlane.xlu0 %567
    %v569 = vld [vmem:[#allocation2] sm:$0x1]
    %v571 = vperm.slane %v569, 0
    %v573 = vadd.f32 %v568, %v571
    %v574 = vsub.f32 0.0, %v573
    %v575 = vmul.f32 %v574, 1.442695
    %v576 = vpow.pop %v575
    %v577 = vadd.f32 %v576, 1.0
    %v578 = vrcp.pop %v577
    %vm579 = vcmask 7168
    %580 = vst.msk [vmem:[%s13] sm:$0xff] %vm579, %v578
    // Predicated region
    $region78: #{tpu_custom_call.1} parent=1 // pred_check
      _
    $region79: #{tpu_custom_call.1} parent=1 // pred_check_branch
      %582 = sbr.rel (0) target = $region81
    $region80: #{tpu_custom_call.1} parent=1 // pred_region
      _
    $region81: #{tpu_custom_call.1} parent=1 // pred_fallthru
      _
    // Predicated region
    $region82: #{tpu_custom_call.1} parent=1 // pred_check
      _
    $region83: #{tpu_custom_call.1} parent=1 // pred_check_branch
      %584 = sbr.rel (0) target = $region85
    $region84: #{tpu_custom_call.1} parent=1 // pred_region
      _
    $region85: #{tpu_custom_call.1} parent=1 // pred_fallthru
      _
    %585 = vsyncpa [#allocation4], 1
    %586 = vsyncpa [#allocation6], 1
    %587 = vsyncpa [#allocation9], 1
    %588 = vsyncpa [#allocation12], 1

</llo_original>
